<compile_context>
chip_gen: v7x
topology: tpu7x:2x2x1
jax: 0.10.0
libtpu: 0.0.40
codegen_flags: <defaults>
</compile_context>

<pallas_src>
from functools import partial

import jax
import jax.numpy as jnp
from jax.experimental import pallas as pl
from jax.experimental.pallas import tpu as pltpu

PACK_WIDTH = 128  # lane-dense output slab width (multiple of 128 lanes)


def commnet_kernel(comm_steps, n_agents, enc, num_actions,
                   x_ref, w_enc, b_enc, w_hc, w_hm, b_comm, w_head, b_head,
                   out_ref):
    x = x_ref[...]

    # encoding_layer
    h = jnp.dot(x, w_enc[...], preferred_element_type=jnp.float32) + b_enc[...]

    if comm_steps >= 1:
        inv_nm1 = 1.0 / float(n_agents - 1)
        w_hc_v = w_hc[...]                       # (2E, E) = [[W_h], [W_c]], loaded once
        # Constant across comm steps: H_meta(h_0) with all loop biases folded in.
        bias_sum = (jnp.dot(h, w_hm[...], preferred_element_type=jnp.float32)
                    + b_comm[...])               # = H_meta(h_0) + b_H + b_C (+ b_Hm)

        # Peeled first step: c_0 == 0 so C(c_0) contributes only b_C (in bias_sum).
        h = jnp.tanh(
            jnp.dot(h, w_hc_v[:enc, :], preferred_element_type=jnp.float32) + bias_sum)

        # Remaining comm steps (comm_steps is a static Python int -> unrolled).
        for _ in range(comm_steps - 1):
            c = (jnp.sum(h, axis=0, keepdims=True) - h) * inv_nm1
            hc = jnp.concatenate([h, c], axis=1)         # (n, 2E)
            h = jnp.tanh(
                jnp.dot(hc, w_hc_v, preferred_element_type=jnp.float32) + bias_sum)

    # Fused heads: [logits | value] in a single matmul.
    head = jnp.dot(h, w_head[...], preferred_element_type=jnp.float32) + b_head[...]
    logits = head[:, :num_actions]
    value = head[:, num_actions:num_actions + 1]

    # softmax(logits) -> log-probs + entropy, without materializing probs.
    m = jnp.max(logits, axis=-1, keepdims=True)
    z = logits - m
    ez = jnp.exp(z)
    s = jnp.sum(ez, axis=-1, keepdims=True)
    log_s = jnp.log(s)
    log_probs = z - log_s
    entropy = (log_s
               - jnp.sum(ez * z, axis=-1, keepdims=True) * pl.reciprocal(s, approx=True))

    # Single lane-dense output slab: [log_probs | value | entropy | zero pad].
    out_ref[...] = jnp.zeros_like(out_ref)
    out_ref[:, :num_actions] = log_probs
    out_ref[:, num_actions:num_actions + 1] = value
    out_ref[:, num_actions + 1:num_actions + 2] = entropy


def fuse_params(p):
    """Exact offline algebraic folds of the per-layer params (done once)."""
    w_tvv = p["w_tv"] @ p["w_v"]                       # (E, 1): value head fold
    b_tvv = p["b_tv"] @ p["w_v"] + p["b_v"]            # (1, 1)
    return {
        "w_enc": p["w_enc"], "b_enc": p["b_enc"],
        "w_hc": jnp.concatenate([p["w_h"], p["w_c"]], axis=0),    # (2E, E)
        "w_hm": p["w_hm"],
        "b_comm": p["b_hm"] + p["b_h"] + p["b_c"],                # (1, E)
        "w_head": jnp.concatenate([p["w_out"], w_tvv], axis=1),   # (E, A+1)
        "b_head": jnp.concatenate([p["b_out"], b_tvv], axis=1),   # (1, A+1)
    }


def commnet_forward(x, fused, *, comm_steps, num_actions, sample_key):
    """Returns (action, state_value, logprob, entropy) like CommNet.forward."""
    n_agents, _ = x.shape
    enc = fused["w_enc"].shape[1]
    assert num_actions + 2 <= PACK_WIDTH

    kernel = partial(commnet_kernel, comm_steps, n_agents, enc, num_actions)
    vmem = pl.BlockSpec(memory_space=pltpu.MemorySpace.VMEM)

    slab = pl.pallas_call(
        kernel,
        out_shape=jax.ShapeDtypeStruct((n_agents, PACK_WIDTH), jnp.float32),
        in_specs=[vmem] * 8,
        out_specs=vmem,
    )(x, fused["w_enc"], fused["b_enc"], fused["w_hc"], fused["w_hm"],
      fused["b_comm"], fused["w_head"], fused["b_head"])

    log_probs = slab[:, :num_actions]
    state_value = slab[:, num_actions:num_actions + 1]
    entropy = slab[:, num_actions + 1]

    # Categorical sampling / chosen-log-prob gather (glue, not the hot path).
    action = jax.random.categorical(sample_key, log_probs, axis=-1)           # (n,)
    logprob = jnp.take_along_axis(log_probs, action[:, None], axis=-1)[:, 0]  # (n,)
    return action, state_value, logprob, entropy


def init_params(key, input_features, encoding_size, num_actions):
    """Deterministic init mimicking nn.Linear default (uniform +-1/sqrt(fan_in)).
    Weights are stored pre-transposed as (in, out); biases as (1, out)."""
    def linear(k, fan_in, fan_out):
        kw, kb = jax.random.split(k)
        bound = 1.0 / jnp.sqrt(float(fan_in))
        w = jax.random.uniform(kw, (fan_in, fan_out), jnp.float32, -bound, bound)
        b = jax.random.uniform(kb, (1, fan_out), jnp.float32, -bound, bound)
        return w, b

    keys = jax.random.split(key, 7)
    p = {}
    p["w_enc"], p["b_enc"] = linear(keys[0], input_features, encoding_size)
    p["w_h"],   p["b_h"]   = linear(keys[1], encoding_size, encoding_size)
    p["w_c"],   p["b_c"]   = linear(keys[2], encoding_size, encoding_size)
    p["w_hm"],  p["b_hm"]  = linear(keys[3], encoding_size, encoding_size)
    p["w_out"], p["b_out"] = linear(keys[4], encoding_size, num_actions)
    p["w_tv"],  p["b_tv"]  = linear(keys[5], encoding_size, encoding_size)
    p["w_v"],   p["b_v"]   = linear(keys[6], encoding_size, 1)
    return p


if __name__ == "__main__":
    n_agents = 8
    input_features = 16
    encoding_size = 32
    num_actions = 4
    comm_steps = 2

    root = jax.random.PRNGKey(0)
    k_x, k_params, k_sample = jax.random.split(root, 3)

    x = jax.random.normal(k_x, (n_agents, input_features), jnp.float32)
    params = init_params(k_params, input_features, encoding_size, num_actions)
    fused = fuse_params(params)   # one-time parameter prep, outside the hot path

    action, state_value, logprob, entropy = commnet_forward(
        x, fused, comm_steps=comm_steps, num_actions=num_actions, sample_key=k_sample
    )
    jax.block_until_ready((action, state_value, logprob, entropy))

    assert action.shape == (n_agents,)
    assert state_value.shape == (n_agents, 1)
    assert logprob.shape == (n_agents,)
    assert entropy.shape == (n_agents,)
    assert bool(jnp.all(jnp.isfinite(state_value)))
    assert bool(jnp.all(jnp.isfinite(logprob)))
    print("KERNEL_OK")
</pallas_src>

<mosaic_0001>
module attributes {stable_mosaic.version = 11 : i64} {
  func.func @commnet_kernel(%arg0: memref<8x16xf32, #tpu.memory_space<vmem>>, %arg1: memref<16x32xf32, #tpu.memory_space<vmem>>, %arg2: memref<1x32xf32, #tpu.memory_space<vmem>>, %arg3: memref<64x32xf32, #tpu.memory_space<vmem>>, %arg4: memref<32x32xf32, #tpu.memory_space<vmem>>, %arg5: memref<1x32xf32, #tpu.memory_space<vmem>>, %arg6: memref<32x5xf32, #tpu.memory_space<vmem>>, %arg7: memref<1x5xf32, #tpu.memory_space<vmem>>, %arg8: memref<8x128xf32, #tpu.memory_space<vmem>>) attributes {dimension_semantics = [], scalar_prefetch = 0 : i64, scratch_operands = 0 : i64, tpu.core_type = #tpu.core_type<tc>} {
    %c0 = arith.constant 0 : index
    %c0_0 = arith.constant 0 : index
    %0 = vector.load %arg0[%c0, %c0_0] : memref<8x16xf32, #tpu.memory_space<vmem>>, vector<8x16xf32>
    %c0_1 = arith.constant 0 : index
    %c0_2 = arith.constant 0 : index
    %1 = vector.load %arg1[%c0_1, %c0_2] : memref<16x32xf32, #tpu.memory_space<vmem>>, vector<16x32xf32>
    %cst = arith.constant dense<0.000000e+00> : vector<8x32xf32>
    %2 = tpu.matmul %0, %1, %cst {dimension_numbers = #tpu.dot_dimension_numbers<[1], [0], [0], [1], [0, 0, 1, 1], [], []>} : vector<8x16xf32>, vector<16x32xf32>, vector<8x32xf32> -> vector<8x32xf32>
    %c0_3 = arith.constant 0 : index
    %c0_4 = arith.constant 0 : index
    %3 = vector.load %arg2[%c0_3, %c0_4] : memref<1x32xf32, #tpu.memory_space<vmem>>, vector<1x32xf32>
    %4 = vector.broadcast %3 : vector<1x32xf32> to vector<8x32xf32>
    %5 = arith.addf %2, %4 : vector<8x32xf32>
    %c0_5 = arith.constant 0 : index
    %c0_6 = arith.constant 0 : index
    %6 = vector.load %arg3[%c0_5, %c0_6] : memref<64x32xf32, #tpu.memory_space<vmem>>, vector<64x32xf32>
    %c0_7 = arith.constant 0 : index
    %c0_8 = arith.constant 0 : index
    %7 = vector.load %arg4[%c0_7, %c0_8] : memref<32x32xf32, #tpu.memory_space<vmem>>, vector<32x32xf32>
    %cst_9 = arith.constant dense<0.000000e+00> : vector<8x32xf32>
    %8 = tpu.matmul %5, %7, %cst_9 {dimension_numbers = #tpu.dot_dimension_numbers<[1], [0], [0], [1], [0, 0, 1, 1], [], []>} : vector<8x32xf32>, vector<32x32xf32>, vector<8x32xf32> -> vector<8x32xf32>
    %c0_10 = arith.constant 0 : index
    %c0_11 = arith.constant 0 : index
    %9 = vector.load %arg5[%c0_10, %c0_11] : memref<1x32xf32, #tpu.memory_space<vmem>>, vector<1x32xf32>
    %10 = vector.broadcast %9 : vector<1x32xf32> to vector<8x32xf32>
    %11 = arith.addf %8, %10 : vector<8x32xf32>
    %12 = vector.extract_strided_slice %6 {offsets = [0, 0], sizes = [32, 32], strides = [1, 1]} : vector<64x32xf32> to vector<32x32xf32>
    %cst_12 = arith.constant dense<0.000000e+00> : vector<8x32xf32>
    %13 = tpu.matmul %5, %12, %cst_12 {dimension_numbers = #tpu.dot_dimension_numbers<[1], [0], [0], [1], [0, 0, 1, 1], [], []>} : vector<8x32xf32>, vector<32x32xf32>, vector<8x32xf32> -> vector<8x32xf32>
    %14 = arith.addf %13, %11 : vector<8x32xf32>
    %15 = math.tanh %14 : vector<8x32xf32>
    %cst_13 = arith.constant dense<0.000000e+00> : vector<32xf32>
    %16 = vector.multi_reduction <add>, %15, %cst_13 [0] : vector<8x32xf32> to vector<32xf32>
    %17 = vector.shape_cast %16 : vector<32xf32> to vector<1x32xf32>
    %18 = vector.broadcast %17 : vector<1x32xf32> to vector<8x32xf32>
    %19 = arith.subf %18, %15 : vector<8x32xf32>
    %cst_14 = arith.constant 0.142857149 : f32
    %20 = vector.broadcast %cst_14 : f32 to vector<8x32xf32>
    %21 = arith.mulf %19, %20 : vector<8x32xf32>
    %22 = tpu.concatenate %15, %21 in 1 : vector<8x32xf32>, vector<8x32xf32> -> vector<8x64xf32>
    %cst_15 = arith.constant dense<0.000000e+00> : vector<8x32xf32>
    %23 = tpu.matmul %22, %6, %cst_15 {dimension_numbers = #tpu.dot_dimension_numbers<[1], [0], [0], [1], [0, 0, 1, 1], [], []>} : vector<8x64xf32>, vector<64x32xf32>, vector<8x32xf32> -> vector<8x32xf32>
    %24 = arith.addf %23, %11 : vector<8x32xf32>
    %25 = math.tanh %24 : vector<8x32xf32>
    %c0_16 = arith.constant 0 : index
    %c0_17 = arith.constant 0 : index
    %26 = vector.load %arg6[%c0_16, %c0_17] : memref<32x5xf32, #tpu.memory_space<vmem>>, vector<32x5xf32>
    %cst_18 = arith.constant dense<0.000000e+00> : vector<8x5xf32>
    %27 = tpu.matmul %25, %26, %cst_18 {dimension_numbers = #tpu.dot_dimension_numbers<[1], [0], [0], [1], [0, 0, 1, 1], [], []>} : vector<8x32xf32>, vector<32x5xf32>, vector<8x5xf32> -> vector<8x5xf32>
    %c0_19 = arith.constant 0 : index
    %c0_20 = arith.constant 0 : index
    %28 = vector.load %arg7[%c0_19, %c0_20] : memref<1x5xf32, #tpu.memory_space<vmem>>, vector<1x5xf32>
    %29 = vector.broadcast %28 : vector<1x5xf32> to vector<8x5xf32>
    %30 = arith.addf %27, %29 : vector<8x5xf32>
    %31 = vector.extract_strided_slice %30 {offsets = [0, 0], sizes = [8, 4], strides = [1, 1]} : vector<8x5xf32> to vector<8x4xf32>
    %32 = vector.extract_strided_slice %30 {offsets = [0, 4], sizes = [8, 1], strides = [1, 1]} : vector<8x5xf32> to vector<8x1xf32>
    %cst_21 = arith.constant dense<0xFF800000> : vector<8xf32>
    %33 = vector.multi_reduction <maximumf>, %31, %cst_21 [1] : vector<8x4xf32> to vector<8xf32>
    %34 = vector.shape_cast %33 : vector<8xf32> to vector<8x1xf32>
    %35 = vector.broadcast %34 : vector<8x1xf32> to vector<8x4xf32>
    %36 = arith.subf %31, %35 : vector<8x4xf32>
    %37 = math.exp %36 : vector<8x4xf32>
    %cst_22 = arith.constant dense<0.000000e+00> : vector<8xf32>
    %38 = vector.multi_reduction <add>, %37, %cst_22 [1] : vector<8x4xf32> to vector<8xf32>
    %39 = vector.shape_cast %38 : vector<8xf32> to vector<8x1xf32>
    %40 = math.log %39 : vector<8x1xf32>
    %41 = vector.broadcast %40 : vector<8x1xf32> to vector<8x4xf32>
    %42 = arith.subf %36, %41 : vector<8x4xf32>
    %43 = arith.mulf %37, %36 : vector<8x4xf32>
    %cst_23 = arith.constant dense<0.000000e+00> : vector<8xf32>
    %44 = vector.multi_reduction <add>, %43, %cst_23 [1] : vector<8x4xf32> to vector<8xf32>
    %45 = vector.shape_cast %44 : vector<8xf32> to vector<8x1xf32>
    %46 = tpu.reciprocal %39 {approx = true} : vector<8x1xf32> -> vector<8x1xf32>
    %47 = arith.mulf %45, %46 : vector<8x1xf32>
    %48 = arith.subf %40, %47 : vector<8x1xf32>
    %cst_24 = arith.constant 0.000000e+00 : f32
    %49 = vector.broadcast %cst_24 : f32 to vector<8x128xf32>
    %c0_25 = arith.constant 0 : index
    %c0_26 = arith.constant 0 : index
    %50 = vector.load %arg8[%c0_25, %c0_26] : memref<8x128xf32, #tpu.memory_space<vmem>>, vector<8x128xf32>
    tpu.vector_store %arg8[%c0_25, %c0_26], %49 {strides = array<i32>} : memref<8x128xf32, #tpu.memory_space<vmem>>, vector<8x128xf32>,
    %c0_27 = arith.constant 0 : index
    %c0_28 = arith.constant 0 : index
    %51 = vector.load %arg8[%c0_27, %c0_28] : memref<8x128xf32, #tpu.memory_space<vmem>>, vector<8x4xf32>
    tpu.vector_store %arg8[%c0_27, %c0_28], %42 {strides = array<i32>} : memref<8x128xf32, #tpu.memory_space<vmem>>, vector<8x4xf32>,
    %c0_29 = arith.constant 0 : index
    %c4 = arith.constant 4 : index
    %52 = vector.load %arg8[%c0_29, %c4] : memref<8x128xf32, #tpu.memory_space<vmem>>, vector<8x1xf32>
    tpu.vector_store %arg8[%c0_29, %c4], %32 {strides = array<i32>} : memref<8x128xf32, #tpu.memory_space<vmem>>, vector<8x1xf32>,
    %c0_30 = arith.constant 0 : index
    %c5 = arith.constant 5 : index
    %53 = vector.load %arg8[%c0_30, %c5] : memref<8x128xf32, #tpu.memory_space<vmem>>, vector<8x1xf32>
    tpu.vector_store %arg8[%c0_30, %c5], %48 {strides = array<i32>} : memref<8x128xf32, #tpu.memory_space<vmem>>, vector<8x1xf32>,
    return
  }
}

</mosaic_0001>

<llo_original>
// kernel: tpu_custom_call.1
$region0: #{tpu_custom_call.1}
  #allocation0 [shape = 'u32[]', space=smem, size = 0x4, offset = 0x4, fixed_abs, tag = 'smem constant byte address 0x4 - core index']
  #allocation1 [shape = 'u32[144,128]{1,0:T(1,128)}', space=vmem, size = 0x12000, scoped, tag = 'internal scratch']
  %s0 = inlined_call_operand.vmem [shape: f32[8,16], index: 0, kind: input, shape index: {}]
  %s1 = inlined_call_operand.vmem [shape: f32[16,32], index: 1, kind: input, shape index: {}]
  %s2 = inlined_call_operand.vmem [shape: f32[1,32], index: 2, kind: input, shape index: {}]
  %s3 = inlined_call_operand.vmem [shape: f32[64,32], index: 3, kind: input, shape index: {}]
  %s4 = inlined_call_operand.vmem [shape: f32[32,32], index: 4, kind: input, shape index: {}]
  %s5 = inlined_call_operand.vmem [shape: f32[1,32], index: 5, kind: input, shape index: {}]
  %s6 = inlined_call_operand.vmem [shape: f32[32,5], index: 6, kind: input, shape index: {}]
  %s7 = inlined_call_operand.vmem [shape: f32[1,5], index: 7, kind: input, shape index: {}]
  %s8 = inlined_call_operand.hbm [shape: f32[8,128], index: 8, kind: output, shape index: {}]
  %s9 = sld [smem:[#allocation0]]
  $region42: #{tpu_custom_call.1} parent=0
    _
  %s11 = ssub.s32 1, %s9
  %s12 = scalar_select 0, %s11, %s9
  $region1: #{tpu_custom_call.1} parent=0
    #allocation2 [shape = 'u8[4096]{0}', space=vmem, size = 0x1000, scoped, tag = 'output window, operand 0, single buffered']
    #allocation3 [shape = 's32[1]{0}', space=sflag, size = 0x4, scoped, tag = 'scoped memory for tpu_custom_call.1']
    %13 = vsyncpa [#allocation3], 0
    // Predicated region
    $region2: #{tpu_custom_call.1} parent=1 // pred_check
      _
    $region3: #{tpu_custom_call.1} parent=1 // pred_check_branch
      %15 = sbr.rel (0) target = $region5
    $region4: #{tpu_custom_call.1} parent=1 // pred_region
      _
    $region5: #{tpu_custom_call.1} parent=1 // pred_fallthru
      _
    // Predicated region
    $region6: #{tpu_custom_call.1} parent=1 // pred_check
      _
    $region7: #{tpu_custom_call.1} parent=1 // pred_check_branch
      %17 = sbr.rel (0) target = $region9
    $region8: #{tpu_custom_call.1} parent=1 // pred_region
      _
    $region9: #{tpu_custom_call.1} parent=1 // pred_fallthru
      _
    // Predicated region
    $region10: #{tpu_custom_call.1} parent=1 // pred_check
      _
    $region11: #{tpu_custom_call.1} parent=1 // pred_check_branch
      %19 = sbr.rel (0) target = $region13
    $region12: #{tpu_custom_call.1} parent=1 // pred_region
      _
    $region13: #{tpu_custom_call.1} parent=1 // pred_fallthru
      _
    // Predicated region
    $region14: #{tpu_custom_call.1} parent=1 // pred_check
      _
    $region15: #{tpu_custom_call.1} parent=1 // pred_check_branch
      %21 = sbr.rel (0) target = $region17
    $region16: #{tpu_custom_call.1} parent=1 // pred_region
      _
    $region17: #{tpu_custom_call.1} parent=1 // pred_fallthru
      _
    // Predicated region
    $region18: #{tpu_custom_call.1} parent=1 // pred_check
      _
    $region19: #{tpu_custom_call.1} parent=1 // pred_check_branch
      %23 = sbr.rel (0) target = $region21
    $region20: #{tpu_custom_call.1} parent=1 // pred_region
      _
    $region21: #{tpu_custom_call.1} parent=1 // pred_fallthru
      _
    // Predicated region
    $region22: #{tpu_custom_call.1} parent=1 // pred_check
      _
    $region23: #{tpu_custom_call.1} parent=1 // pred_check_branch
      %25 = sbr.rel (0) target = $region25
    $region24: #{tpu_custom_call.1} parent=1 // pred_region
      _
    $region25: #{tpu_custom_call.1} parent=1 // pred_fallthru
      _
    // Predicated region
    $region26: #{tpu_custom_call.1} parent=1 // pred_check
      _
    $region27: #{tpu_custom_call.1} parent=1 // pred_check_branch
      %27 = sbr.rel (0) target = $region29
    $region28: #{tpu_custom_call.1} parent=1 // pred_region
      _
    $region29: #{tpu_custom_call.1} parent=1 // pred_fallthru
      _
    // Predicated region
    $region30: #{tpu_custom_call.1} parent=1 // pred_check
      _
    $region31: #{tpu_custom_call.1} parent=1 // pred_check_branch
      %29 = sbr.rel (0) target = $region33
    $region32: #{tpu_custom_call.1} parent=1 // pred_region
      _
    $region33: #{tpu_custom_call.1} parent=1 // pred_fallthru
      _
    %v30 = vld [vmem:[%s0] sm:$0xff]
    %v31 = vld [vmem:[%s1] sm:$0xff]
    %v32 = vld [vmem:[%s1 + $0x8] sm:$0xff]
    %v33 = vld [vmem:[%s2] sm:$0x1]
    %v35 = vlaneseq
    %v36 = vshrl.u32 %v35, 7
    %v37 = vsub.s32 0, %v36
    %v38 = vrot.slane %v33, %v37
    %vm40 = vcmask 130048
    %v42 = vsel %vm40, %v30, 0
    %44 = vmatprep.subr.mxu0 0.0
    %45 = vmatpush1.msra.mxu0 %v31
    %46 = vmatprep.subr.mxu0 0.0
    %47 = vmatpush1.msra.mxu0 %v32
    %48 = vmatprep.subr.mxu0 0.0
    %49 = vmatpush1.msra.mxu0 0.0
    %50 = vmatprep.subr.mxu0 0.0
    %51 = vmatpush1.msra.mxu0 0.0
    %52 = vmatprep.subr.mxu0 0.0
    %53 = vmatpush1.msra.mxu0 0.0
    %54 = vmatprep.subr.mxu0 0.0
    %55 = vmatpush1.msra.mxu0 0.0
    %56 = vmatprep.subr.mxu0 0.0
    %57 = vmatpush1.msra.mxu0 0.0
    %58 = vmatprep.subr.mxu0 0.0
    %59 = vmatpush1.msra.mxu0 0.0
    %60 = vmatprep.subr.mxu0 0.0
    %61 = vmatpush1.msra.mxu0 0.0
    %62 = vmatprep.subr.mxu0 0.0
    %63 = vmatpush1.msra.mxu0 0.0
    %64 = vmatprep.subr.mxu0 0.0
    %65 = vmatpush1.msra.mxu0 0.0
    %66 = vmatprep.subr.mxu0 0.0
    %67 = vmatpush1.msra.mxu0 0.0
    %68 = vmatprep.subr.mxu0 0.0
    %69 = vmatpush1.msra.mxu0 0.0
    %70 = vmatprep.subr.mxu0 0.0
    %71 = vmatpush1.msra.mxu0 0.0
    %72 = vmatprep.subr.mxu0 0.0
    %73 = vmatpush1.msra.mxu0 0.0
    %74 = vmatprep.subr.mxu0 0.0
    %75 = vmatpush1.msra.mxu0 0.0
    %76 = vmatprep.subr.mxu0 0.0
    %77 = vmatpush1.msra.mxu0 0.0
    %78 = vmatprep.subr.mxu0 0.0
    %79 = vmatpush1.msra.mxu0 0.0
    %80 = vmatprep.subr.mxu0 0.0
    %81 = vmatpush1.msra.mxu0 0.0
    %82 = vmatprep.subr.mxu0 0.0
    %83 = vmatpush1.msra.mxu0 0.0
    %84 = vmatprep.subr.mxu0 0.0
    %85 = vmatpush1.msra.mxu0 0.0
    %86 = vmatprep.subr.mxu0 0.0
    %87 = vmatpush1.msra.mxu0 0.0
    %88 = vmatprep.subr.mxu0 0.0
    %89 = vmatpush1.msra.mxu0 0.0
    %90 = vmatprep.subr.mxu0 0.0
    %91 = vmatpush1.msra.mxu0 0.0
    %92 = vmatprep.subr.mxu0 0.0
    %93 = vmatpush1.msra.mxu0 0.0
    %94 = vmatprep.subr.mxu0 0.0
    %95 = vmatpush1.msra.mxu0 0.0
    %96 = vmatprep.subr.mxu0 0.0
    %97 = vmatpush1.msra.mxu0 0.0
    %98 = vmatprep.subr.mxu0 0.0
    %99 = vmatpush1.msra.mxu0 0.0
    %100 = vmatprep.subr.mxu0 0.0
    %101 = vmatpush1.msra.mxu0 0.0
    %102 = vmatprep.subr.mxu0 0.0
    %103 = vmatpush1.msra.mxu0 0.0
    %104 = vmatprep.subr.mxu0 0.0
    %105 = vmatpush1.msra.mxu0 0.0
    %106 = vmatprep.subr.mxu0 0.0
    %107 = vmatpush1.msra.mxu0 0.0
    %108 = vmatprep.mubr.f32.mxu0 0.0
    %109 = vmatmul.mubr.f32.gmra.mrb[0].mxu0 %v42
    %v110 = vpop.f32.mrb[0].mxu0
    %v111 = vadd.f32 %v38, %v110
    %v112 = vpop.f32.mrb[0].mxu0
    %113 = vdwg.mxu0
    %v114 = vld [vmem:[%s3] sm:$0xff]
    %v115 = vld [vmem:[%s3 + $0x8] sm:$0xff]
    %v116 = vld [vmem:[%s3 + $0x10] sm:$0xff]
    %v117 = vld [vmem:[%s3 + $0x18] sm:$0xff]
    %v118 = vld [vmem:[%s3 + $0x20] sm:$0xff]
    %v119 = vld [vmem:[%s3 + $0x28] sm:$0xff]
    %v120 = vld [vmem:[%s3 + $0x30] sm:$0xff]
    %v121 = vld [vmem:[%s3 + $0x38] sm:$0xff]
    %v122 = vld [vmem:[%s4] sm:$0xff]
    %v123 = vld [vmem:[%s4 + $0x8] sm:$0xff]
    %v124 = vld [vmem:[%s4 + $0x10] sm:$0xff]
    %v125 = vld [vmem:[%s4 + $0x18] sm:$0xff]
    %v126 = vld [vmem:[%s5] sm:$0x1]
    %v128 = vlaneseq
    %v129 = vshrl.u32 %v128, 7
    %v130 = vsub.s32 0, %v129
    %v131 = vrot.slane %v126, %v130
    %vm133 = vcmask 261120
    %v135 = vsel %vm133, %v111, 0
    %137 = vmatprep.subr.mxu0 0.0
    %138 = vmatpush1.msra.mxu0 %v122
    %139 = vmatprep.subr.mxu0 0.0
    %140 = vmatpush1.msra.mxu0 %v123
    %141 = vmatprep.subr.mxu0 0.0
    %142 = vmatpush1.msra.mxu0 %v124
    %143 = vmatprep.subr.mxu0 0.0
    %144 = vmatpush1.msra.mxu0 %v125
    %145 = vmatprep.subr.mxu0 0.0
    %146 = vmatpush1.msra.mxu0 0.0
    %147 = vmatprep.subr.mxu0 0.0
    %148 = vmatpush1.msra.mxu0 0.0
    %149 = vmatprep.subr.mxu0 0.0
    %150 = vmatpush1.msra.mxu0 0.0
    %151 = vmatprep.subr.mxu0 0.0
    %152 = vmatpush1.msra.mxu0 0.0
    %153 = vmatprep.subr.mxu0 0.0
    %154 = vmatpush1.msra.mxu0 0.0
    %155 = vmatprep.subr.mxu0 0.0
    %156 = vmatpush1.msra.mxu0 0.0
    %157 = vmatprep.subr.mxu0 0.0
    %158 = vmatpush1.msra.mxu0 0.0
    %159 = vmatprep.subr.mxu0 0.0
    %160 = vmatpush1.msra.mxu0 0.0
    %161 = vmatprep.subr.mxu0 0.0
    %162 = vmatpush1.msra.mxu0 0.0
    %163 = vmatprep.subr.mxu0 0.0
    %164 = vmatpush1.msra.mxu0 0.0
    %165 = vmatprep.subr.mxu0 0.0
    %166 = vmatpush1.msra.mxu0 0.0
    %167 = vmatprep.subr.mxu0 0.0
    %168 = vmatpush1.msra.mxu0 0.0
    %169 = vmatprep.subr.mxu0 0.0
    %170 = vmatpush1.msra.mxu0 0.0
    %171 = vmatprep.subr.mxu0 0.0
    %172 = vmatpush1.msra.mxu0 0.0
    %173 = vmatprep.subr.mxu0 0.0
    %174 = vmatpush1.msra.mxu0 0.0
    %175 = vmatprep.subr.mxu0 0.0
    %176 = vmatpush1.msra.mxu0 0.0
    %177 = vmatprep.subr.mxu0 0.0
    %178 = vmatpush1.msra.mxu0 0.0
    %179 = vmatprep.subr.mxu0 0.0
    %180 = vmatpush1.msra.mxu0 0.0
    %181 = vmatprep.subr.mxu0 0.0
    %182 = vmatpush1.msra.mxu0 0.0
    %183 = vmatprep.subr.mxu0 0.0
    %184 = vmatpush1.msra.mxu0 0.0
    %185 = vmatprep.subr.mxu0 0.0
    %186 = vmatpush1.msra.mxu0 0.0
    %187 = vmatprep.subr.mxu0 0.0
    %188 = vmatpush1.msra.mxu0 0.0
    %189 = vmatprep.subr.mxu0 0.0
    %190 = vmatpush1.msra.mxu0 0.0
    %191 = vmatprep.subr.mxu0 0.0
    %192 = vmatpush1.msra.mxu0 0.0
    %193 = vmatprep.subr.mxu0 0.0
    %194 = vmatpush1.msra.mxu0 0.0
    %195 = vmatprep.subr.mxu0 0.0
    %196 = vmatpush1.msra.mxu0 0.0
    %197 = vmatprep.subr.mxu0 0.0
    %198 = vmatpush1.msra.mxu0 0.0
    %199 = vmatprep.subr.mxu0 0.0
    %200 = vmatpush1.msra.mxu0 0.0
    %201 = vmatprep.mubr.f32.mxu0 0.0
    %202 = vmatmul.mubr.f32.gmra.mrb[0].mxu0 %v135
    %v203 = vpop.f32.mrb[0].mxu0
    %v204 = vadd.f32 %v131, %v203
    %v205 = vpop.f32.mrb[0].mxu0
    %206 = vdwg.mxu0
    %207 = vmatprep.subr.mxu0 0.0
    %208 = vmatpush1.msra.mxu0 %v114
    %209 = vmatprep.subr.mxu0 0.0
    %210 = vmatpush1.msra.mxu0 %v115
    %211 = vmatprep.subr.mxu0 0.0
    %212 = vmatpush1.msra.mxu0 %v116
    %213 = vmatprep.subr.mxu0 0.0
    %214 = vmatpush1.msra.mxu0 %v117
    %215 = vmatprep.subr.mxu0 0.0
    %216 = vmatpush1.msra.mxu0 0.0
    %217 = vmatprep.subr.mxu0 0.0
    %218 = vmatpush1.msra.mxu0 0.0
    %219 = vmatprep.subr.mxu0 0.0
    %220 = vmatpush1.msra.mxu0 0.0
    %221 = vmatprep.subr.mxu0 0.0
    %222 = vmatpush1.msra.mxu0 0.0
    %223 = vmatprep.subr.mxu0 0.0
    %224 = vmatpush1.msra.mxu0 0.0
    %225 = vmatprep.subr.mxu0 0.0
    %226 = vmatpush1.msra.mxu0 0.0
    %227 = vmatprep.subr.mxu0 0.0
    %228 = vmatpush1.msra.mxu0 0.0
    %229 = vmatprep.subr.mxu0 0.0
    %230 = vmatpush1.msra.mxu0 0.0
    %231 = vmatprep.subr.mxu0 0.0
    %232 = vmatpush1.msra.mxu0 0.0
    %233 = vmatprep.subr.mxu0 0.0
    %234 = vmatpush1.msra.mxu0 0.0
    %235 = vmatprep.subr.mxu0 0.0
    %236 = vmatpush1.msra.mxu0 0.0
    %237 = vmatprep.subr.mxu0 0.0
    %238 = vmatpush1.msra.mxu0 0.0
    %239 = vmatprep.subr.mxu0 0.0
    %240 = vmatpush1.msra.mxu0 0.0
    %241 = vmatprep.subr.mxu0 0.0
    %242 = vmatpush1.msra.mxu0 0.0
    %243 = vmatprep.subr.mxu0 0.0
    %244 = vmatpush1.msra.mxu0 0.0
    %245 = vmatprep.subr.mxu0 0.0
    %246 = vmatpush1.msra.mxu0 0.0
    %247 = vmatprep.subr.mxu0 0.0
    %248 = vmatpush1.msra.mxu0 0.0
    %249 = vmatprep.subr.mxu0 0.0
    %250 = vmatpush1.msra.mxu0 0.0
    %251 = vmatprep.subr.mxu0 0.0
    %252 = vmatpush1.msra.mxu0 0.0
    %253 = vmatprep.subr.mxu0 0.0
    %254 = vmatpush1.msra.mxu0 0.0
    %255 = vmatprep.subr.mxu0 0.0
    %256 = vmatpush1.msra.mxu0 0.0
    %257 = vmatprep.subr.mxu0 0.0
    %258 = vmatpush1.msra.mxu0 0.0
    %259 = vmatprep.subr.mxu0 0.0
    %260 = vmatpush1.msra.mxu0 0.0
    %261 = vmatprep.subr.mxu0 0.0
    %262 = vmatpush1.msra.mxu0 0.0
    %263 = vmatprep.subr.mxu0 0.0
    %264 = vmatpush1.msra.mxu0 0.0
    %265 = vmatprep.subr.mxu0 0.0
    %266 = vmatpush1.msra.mxu0 0.0
    %267 = vmatprep.subr.mxu0 0.0
    %268 = vmatpush1.msra.mxu0 0.0
    %269 = vmatprep.subr.mxu0 0.0
    %270 = vmatpush1.msra.mxu0 0.0
    %271 = vmatprep.mubr.f32.mxu0 0.0
    %272 = vmatmul.mubr.f32.gmra.mrb[0].mxu0 %v135
    %v273 = vpop.f32.mrb[0].mxu0
    %v274 = vadd.f32 %v204, %v273
    %v275 = vpop.f32.mrb[0].mxu0
    %276 = vdwg.mxu0
    %v277 = vtanh.pop %v274
    %v278 = vsel %vm133, %v277, 0.0
    %v279 = vrot.slane %v278, 4
    %v280 = vadd.f32 %v278, %v279
    %v281 = vrot.slane %v280, 2
    %v282 = vadd.f32 %v280, %v281
    %v283 = vrot.slane %v282, 1
    %v284 = vadd.f32 %v282, %v283
    %v285 = vsub.f32 %v284, %v277
    %v286 = vmul.f32 %v285, 0.14285715
    %288 = vrot.lane.b32.xlu0 %v286, 32
    %v289 = vpop.permute.xlu0 %288
    %v291 = vsel %vm133, %v277, %v289
    %vm292 = vcmask 523264
    %v294 = vsel %vm292, %v291, 0
    %296 = vmatprep.subr.mxu0 0.0
    %297 = vmatpush1.msra.mxu0 %v114
    %298 = vmatprep.subr.mxu0 0.0
    %299 = vmatpush1.msra.mxu0 %v115
    %300 = vmatprep.subr.mxu0 0.0
    %301 = vmatpush1.msra.mxu0 %v116
    %302 = vmatprep.subr.mxu0 0.0
    %303 = vmatpush1.msra.mxu0 %v117
    %304 = vmatprep.subr.mxu0 0.0
    %305 = vmatpush1.msra.mxu0 %v118
    %306 = vmatprep.subr.mxu0 0.0
    %307 = vmatpush1.msra.mxu0 %v119
    %308 = vmatprep.subr.mxu0 0.0
    %309 = vmatpush1.msra.mxu0 %v120
    %310 = vmatprep.subr.mxu0 0.0
    %311 = vmatpush1.msra.mxu0 %v121
    %312 = vmatprep.subr.mxu0 0.0
    %313 = vmatpush1.msra.mxu0 0.0
    %314 = vmatprep.subr.mxu0 0.0
    %315 = vmatpush1.msra.mxu0 0.0
    %316 = vmatprep.subr.mxu0 0.0
    %317 = vmatpush1.msra.mxu0 0.0
    %318 = vmatprep.subr.mxu0 0.0
    %319 = vmatpush1.msra.mxu0 0.0
    %320 = vmatprep.subr.mxu0 0.0
    %321 = vmatpush1.msra.mxu0 0.0
    %322 = vmatprep.subr.mxu0 0.0
    %323 = vmatpush1.msra.mxu0 0.0
    %324 = vmatprep.subr.mxu0 0.0
    %325 = vmatpush1.msra.mxu0 0.0
    %326 = vmatprep.subr.mxu0 0.0
    %327 = vmatpush1.msra.mxu0 0.0
    %328 = vmatprep.subr.mxu0 0.0
    %329 = vmatpush1.msra.mxu0 0.0
    %330 = vmatprep.subr.mxu0 0.0
    %331 = vmatpush1.msra.mxu0 0.0
    %332 = vmatprep.subr.mxu0 0.0
    %333 = vmatpush1.msra.mxu0 0.0
    %334 = vmatprep.subr.mxu0 0.0
    %335 = vmatpush1.msra.mxu0 0.0
    %336 = vmatprep.subr.mxu0 0.0
    %337 = vmatpush1.msra.mxu0 0.0
    %338 = vmatprep.subr.mxu0 0.0
    %339 = vmatpush1.msra.mxu0 0.0
    %340 = vmatprep.subr.mxu0 0.0
    %341 = vmatpush1.msra.mxu0 0.0
    %342 = vmatprep.subr.mxu0 0.0
    %343 = vmatpush1.msra.mxu0 0.0
    %344 = vmatprep.subr.mxu0 0.0
    %345 = vmatpush1.msra.mxu0 0.0
    %346 = vmatprep.subr.mxu0 0.0
    %347 = vmatpush1.msra.mxu0 0.0
    %348 = vmatprep.subr.mxu0 0.0
    %349 = vmatpush1.msra.mxu0 0.0
    %350 = vmatprep.subr.mxu0 0.0
    %351 = vmatpush1.msra.mxu0 0.0
    %352 = vmatprep.subr.mxu0 0.0
    %353 = vmatpush1.msra.mxu0 0.0
    %354 = vmatprep.subr.mxu0 0.0
    %355 = vmatpush1.msra.mxu0 0.0
    %356 = vmatprep.subr.mxu0 0.0
    %357 = vmatpush1.msra.mxu0 0.0
    %358 = vmatprep.subr.mxu0 0.0
    %359 = vmatpush1.msra.mxu0 0.0
    %360 = vmatprep.mubr.f32.mxu0 0.0
    %361 = vmatmul.mubr.f32.gmra.mrb[0].mxu0 %v294
    %v362 = vpop.f32.mrb[0].mxu0
    %v363 = vadd.f32 %v204, %v362
    %v364 = vpop.f32.mrb[0].mxu0
    %365 = vdwg.mxu0
    %v366 = vtanh.pop %v363
    %v367 = vld [vmem:[%s6] sm:$0xff]
    %v368 = vld [vmem:[%s6 + $0x8] sm:$0xff]
    %v369 = vld [vmem:[%s6 + $0x10] sm:$0xff]
    %v370 = vld [vmem:[%s6 + $0x18] sm:$0xff]
    %v371 = vld [vmem:[%s7] sm:$0x1]
    %v373 = vlaneseq
    %v374 = vshrl.u32 %v373, 7
    %v375 = vsub.s32 0, %v374
    %v376 = vrot.slane %v371, %v375
    %v379 = vsel %vm133, %v366, 0
    %381 = vmatprep.subr.mxu0 0.0
    %382 = vmatpush1.msra.mxu0 %v367
    %383 = vmatprep.subr.mxu0 0.0
    %384 = vmatpush1.msra.mxu0 %v368
    %385 = vmatprep.subr.mxu0 0.0
    %386 = vmatpush1.msra.mxu0 %v369
    %387 = vmatprep.subr.mxu0 0.0
    %388 = vmatpush1.msra.mxu0 %v370
    %389 = vmatprep.subr.mxu0 0.0
    %390 = vmatpush1.msra.mxu0 0.0
    %391 = vmatprep.subr.mxu0 0.0
    %392 = vmatpush1.msra.mxu0 0.0
    %393 = vmatprep.subr.mxu0 0.0
    %394 = vmatpush1.msra.mxu0 0.0
    %395 = vmatprep.subr.mxu0 0.0
    %396 = vmatpush1.msra.mxu0 0.0
    %397 = vmatprep.subr.mxu0 0.0
    %398 = vmatpush1.msra.mxu0 0.0
    %399 = vmatprep.subr.mxu0 0.0
    %400 = vmatpush1.msra.mxu0 0.0
    %401 = vmatprep.subr.mxu0 0.0
    %402 = vmatpush1.msra.mxu0 0.0
    %403 = vmatprep.subr.mxu0 0.0
    %404 = vmatpush1.msra.mxu0 0.0
    %405 = vmatprep.subr.mxu0 0.0
    %406 = vmatpush1.msra.mxu0 0.0
    %407 = vmatprep.subr.mxu0 0.0
    %408 = vmatpush1.msra.mxu0 0.0
    %409 = vmatprep.subr.mxu0 0.0
    %410 = vmatpush1.msra.mxu0 0.0
    %411 = vmatprep.subr.mxu0 0.0
    %412 = vmatpush1.msra.mxu0 0.0
    %413 = vmatprep.subr.mxu0 0.0
    %414 = vmatpush1.msra.mxu0 0.0
    %415 = vmatprep.subr.mxu0 0.0
    %416 = vmatpush1.msra.mxu0 0.0
    %417 = vmatprep.subr.mxu0 0.0
    %418 = vmatpush1.msra.mxu0 0.0
    %419 = vmatprep.subr.mxu0 0.0
    %420 = vmatpush1.msra.mxu0 0.0
    %421 = vmatprep.subr.mxu0 0.0
    %422 = vmatpush1.msra.mxu0 0.0
    %423 = vmatprep.subr.mxu0 0.0
    %424 = vmatpush1.msra.mxu0 0.0
    %425 = vmatprep.subr.mxu0 0.0
    %426 = vmatpush1.msra.mxu0 0.0
    %427 = vmatprep.subr.mxu0 0.0
    %428 = vmatpush1.msra.mxu0 0.0
    %429 = vmatprep.subr.mxu0 0.0
    %430 = vmatpush1.msra.mxu0 0.0
    %431 = vmatprep.subr.mxu0 0.0
    %432 = vmatpush1.msra.mxu0 0.0
    %433 = vmatprep.subr.mxu0 0.0
    %434 = vmatpush1.msra.mxu0 0.0
    %435 = vmatprep.subr.mxu0 0.0
    %436 = vmatpush1.msra.mxu0 0.0
    %437 = vmatprep.subr.mxu0 0.0
    %438 = vmatpush1.msra.mxu0 0.0
    %439 = vmatprep.subr.mxu0 0.0
    %440 = vmatpush1.msra.mxu0 0.0
    %441 = vmatprep.subr.mxu0 0.0
    %442 = vmatpush1.msra.mxu0 0.0
    %443 = vmatprep.subr.mxu0 0.0
    %444 = vmatpush1.msra.mxu0 0.0
    %445 = vmatprep.mubr.f32.mxu0 0.0
    %446 = vmatmul.mubr.f32.gmra.mrb[0].mxu0 %v379
    %v447 = vpop.f32.mrb[0].mxu0
    %v448 = vadd.f32 %v376, %v447
    %v449 = vpop.f32.mrb[0].mxu0
    %450 = vdwg.mxu0
    %vm451 = vcmask 31744
    %v452 = vsel %vm451, %v448, -inf
    %453 = vmax.xlane.f32.xlu0 %v452
    %v454 = vpop.xlane.xlu0 %453
    %v455 = vsub.f32 %v448, %v454
    %v456 = vmul.f32 %v455, 1.442695
    %v457 = vpow.pop %v456
    %v458 = vsel %vm451, %v457, 0.0
    %459 = vadd.xlane.f32.xlu0 %v458
    %v460 = vpop.xlane.xlu0 %459
    %v461 = vlog2.pop %v460
    %v462 = vmul.f32 %v461, 0.6931472
    %v463 = vsub.f32 %v455, %v462
    %v464 = vmul.f32 %v457, %v455
    %v465 = vsel %vm451, %v464, 0.0
    %466 = vadd.xlane.f32.xlu0 %v465
    %v467 = vpop.xlane.xlu0 %466
    %v468 = vrcp.pop %v460
    %v469 = vmul.f32 %v467, %v468
    %v470 = vsub.f32 %v462, %v469
    %471 = vst [vmem:[#allocation2] sm:$0xff] 0.0
    %472 = vst.msk [vmem:[#allocation2] sm:$0xff] %vm451, %v463
    %vm473 = vcmask 39968
    %474 = vst.msk [vmem:[#allocation2] sm:$0xff] %vm473, %v448
    %vm475 = vcmask 48168
    %476 = vst.msk [vmem:[#allocation2] sm:$0xff] %vm475, %v470
    // Predicated region
    $region34: #{tpu_custom_call.1} parent=1 // pred_check
      _
    $region35: #{tpu_custom_call.1} parent=1 // pred_check_branch
      %478 = sbr.rel (0) target = $region37
    $region36: #{tpu_custom_call.1} parent=1 // pred_region
      %s480 = ssub.s32 128, 128
      %481 = vsyncadd [#allocation3], %s480
      %s483 = sshll.u32 [#allocation2], 4
      %s484 = int_to_ptr.vmem [resolvable:$true] %s483
      %486 = dma.vmem_to_hbm [thread:$0]  %s484, 128, %s8, [#allocation3]
    $region37: #{tpu_custom_call.1} parent=1 // pred_fallthru
      _
    // Predicated region
    $region38: #{tpu_custom_call.1} parent=1 // pred_check
      _
    $region39: #{tpu_custom_call.1} parent=1 // pred_check_branch
      %488 = sbr.rel (0) target = $region41
    $region40: #{tpu_custom_call.1} parent=1 // pred_region
      %489 = dma.done [#allocation3], 128
    $region41: #{tpu_custom_call.1} parent=1 // pred_fallthru
      _
    %490 = vsyncpa [#allocation3], 1

</llo_original>
